<compile_context>
chip_gen: v5e
topology: v5e:2x2
jax: 0.10.0
libtpu: 0.0.40
codegen_flags: <defaults>
</compile_context>

<pallas_src>
import functools

import jax
import jax.numpy as jnp
from jax import lax
from jax.experimental import pallas as pl
from jax.experimental.pallas import tpu as pltpu

LANE = 128
SUBLANE = 8


def _round_up(x, m):
    return ((x + m - 1) // m) * m


def model_kernel(pre_ref,   # (T*Bp, Hp) pre-projected inputs (x@W_ih^T + b_ih + b_hh), time-major
                 whh_ref,   # (Hp, Hp)   W_hh^T, zero-padded
                 fcw_ref,   # (Hp, Sp)   BN-folded fc1 weight^T, lane-padded with zeros
                 fcb_ref,   # (1, Sp)    BN-folded fc1 bias, padded columns = -1e30
                 out_ref):  # (Bp, Sp)   softmax probabilities (valid block is [:B, :S])
    Bp, Sp = out_ref.shape
    TB, Hp = pre_ref.shape
    T = TB // Bp

    whh = whh_ref[...]                                  # hoisted: loaded once, reused every step

    # ---- RNN(tanh) recurrence: only the serial h @ W_hh + tanh remain per step ----
    def step(t, h):
        off = pl.multiple_of(t * Bp, Bp)                # sublane-aligned slice
        pre_t = pre_ref[pl.ds(off, Bp), :]              # (Bp, Hp) straight from the input VMEM
        return jnp.tanh(pre_t + jnp.dot(h, whh, preferred_element_type=jnp.float32))

    # TODO(synk): cap the unroll (4-8) and stream pre over a grid axis for large T.
    h_last = lax.fori_loop(0, T, step, jnp.zeros((Bp, Hp), jnp.float32), unroll=True)

    # ---- (BN folded) fc1 + softmax over the lane-padded logits ----
    logits = (jnp.dot(h_last, fcw_ref[...], preferred_element_type=jnp.float32)
              + fcb_ref[...])                           # (Bp, Sp); padded cols are -1e30
    m = jnp.max(logits, axis=1, keepdims=True)
    e = jnp.exp(logits - m)                             # padded cols underflow to exactly 0
    denom = jnp.sum(e, axis=1, keepdims=True)
    out_ref[...] = e * pl.reciprocal(denom, approx=True)   # EUP slot, otherwise idle here


def prepare_params(params):
    """One-time weight preparation, hoisted off the per-call path."""
    emb = params["emb"].astype(jnp.float32)             # (V, D), row 0 zero (padding_idx=0)
    wih = params["wih"].astype(jnp.float32)             # (H, D)
    whh = params["whh"].astype(jnp.float32)             # (H, H)
    H = whh.shape[0]
    S = params["fcw"].shape[0]
    Hp = max(LANE, _round_up(H, LANE))                  # lane-dense hidden
    Sp = max(LANE, _round_up(S, LANE))                  # lane-dense logits

    # Pre-projected embedding table: emb @ W_ih^T + (b_ih + b_hh); padded lanes are zero so
    # tanh keeps them exactly zero through the whole recurrence.
    emb_proj = emb @ wih.T + (params["bih"] + params["bhh"]).astype(jnp.float32)   # (V, H)
    emb_proj = jnp.pad(emb_proj, ((0, 0), (0, Hp - H)))                            # (V, Hp)

    whh_pad = jnp.zeros((Hp, Hp), jnp.float32).at[:H, :H].set(whh.T)               # (Hp, Hp)

    # Fold eval-mode BatchNorm1d (running stats, affine) into fc1.
    eps = 1e-5
    scale = params["bn_gamma"] / jnp.sqrt(params["bn_var"] + eps)                  # (H,)
    shift = params["bn_beta"] - params["bn_mean"] * scale                          # (H,)
    fcw_T = params["fcw"].T.astype(jnp.float32)                                    # (H, S)
    fcw_fold = scale[:, None] * fcw_T                                              # (H, S)
    fcb_fold = shift @ fcw_T + params["fcb"].astype(jnp.float32)                   # (S,)

    # Lane-pad fc: zero weights + very negative bias in padded columns => exact padded softmax.
    fcw_pad = jnp.zeros((Hp, Sp), jnp.float32).at[:H, :S].set(fcw_fold)
    fcb_pad = jnp.full((1, Sp), -1e30, jnp.float32).at[0, :S].set(fcb_fold)

    return {"emb_proj": emb_proj, "whh": whh_pad, "fcw": fcw_pad, "fcb": fcb_pad}


@functools.partial(jax.jit, static_argnames=("n_classes",))
def model_forward(x_ids, prep, n_classes):
    """x_ids: (B, T) int32 token ids. Returns (B, n_classes) softmax probabilities."""
    emb_proj = prep["emb_proj"]                          # (V, Hp)
    Hp = emb_proj.shape[1]
    Sp = prep["fcw"].shape[1]
    B, T = x_ids.shape
    Bp = max(SUBLANE, _round_up(B, SUBLANE))             # sublane-dense batch

    # Pad batch rows with token 0 (padding_idx), gather the pre-projected table (V is tiny),
    # go time-major and flatten. This is the only per-call glue and it is fused under jit.
    x_pad = jnp.pad(x_ids, ((0, Bp - B), (0, 0)))        # (Bp, T)
    pre = emb_proj[x_pad]                                # (Bp, T, Hp)
    pre = jnp.transpose(pre, (1, 0, 2)).reshape(T * Bp, Hp)   # (T*Bp, Hp), time-major

    vmem = pltpu.MemorySpace.VMEM
    out = pl.pallas_call(
        model_kernel,
        out_shape=jax.ShapeDtypeStruct((Bp, Sp), jnp.float32),
        in_specs=[pl.BlockSpec(memory_space=vmem)] * 4,
        out_specs=pl.BlockSpec(memory_space=vmem),
    )(pre, prep["whh"], prep["fcw"], prep["fcb"])
    return out[:B, :n_classes]


def reference_forward(x_ids, params):
    """Pure-JAX reference mirroring the PyTorch forward (eval mode)."""
    emb = params["emb"][x_ids]                  # (B, T, D)
    B, T, D = emb.shape
    H = params["whh"].shape[0]
    h = jnp.zeros((B, H), jnp.float32)
    for t in range(T):
        h = jnp.tanh(emb[:, t, :] @ params["wih"].T + params["bih"]
                     + h @ params["whh"].T + params["bhh"])
    eps = 1e-5
    h = (h - params["bn_mean"]) / jnp.sqrt(params["bn_var"] + eps) \
        * params["bn_gamma"] + params["bn_beta"]
    logits = h @ params["fcw"].T + params["fcb"]
    return jax.nn.softmax(logits, axis=1)


def init_params(key, vocab_size, char_dim, hidden_size, sample_length):
    ks = jax.random.split(key, 10)
    emb = jax.random.normal(ks[0], (vocab_size, char_dim), jnp.float32) * 0.1
    emb = emb.at[0].set(0.0)                    # padding_idx=0
    return {
        "emb": emb,
        "wih": jax.random.normal(ks[1], (hidden_size, char_dim), jnp.float32) * 0.1,
        "whh": jax.random.normal(ks[2], (hidden_size, hidden_size), jnp.float32) * 0.1,
        "bih": jax.random.normal(ks[3], (hidden_size,), jnp.float32) * 0.1,
        "bhh": jax.random.normal(ks[4], (hidden_size,), jnp.float32) * 0.1,
        "bn_gamma": 1.0 + 0.1 * jax.random.normal(ks[5], (hidden_size,), jnp.float32),
        "bn_beta": 0.1 * jax.random.normal(ks[6], (hidden_size,), jnp.float32),
        "bn_mean": 0.05 * jax.random.normal(ks[7], (hidden_size,), jnp.float32),
        "bn_var": jnp.abs(1.0 + 0.1 * jax.random.normal(ks[8], (hidden_size,), jnp.float32)),
        "fcw": jax.random.normal(ks[9], (sample_length, hidden_size), jnp.float32) * 0.1,
        "fcb": jnp.linspace(-0.1, 0.1, sample_length, dtype=jnp.float32),
    }


if __name__ == "__main__":
    VOCAB_SIZE = 10
    CHAR_DIM = 32
    HIDDEN = 32
    SAMPLE_LEN = 8      # sequence length == sample_length (as the module implies)
    BATCH = 2

    key = jax.random.PRNGKey(0)
    k_param, k_data = jax.random.split(key)
    params = init_params(k_param, VOCAB_SIZE, CHAR_DIM, HIDDEN, SAMPLE_LEN)
    prep = jax.tree_util.tree_map(jax.block_until_ready, prepare_params(params))  # one-time prep

    x = jax.random.randint(k_data, (BATCH, SAMPLE_LEN), 0, VOCAB_SIZE, dtype=jnp.int32)

    probs = model_forward(x, prep, n_classes=SAMPLE_LEN)
    probs = jax.block_until_ready(probs)

    ref = reference_forward(x, params)
    assert probs.shape == (BATCH, SAMPLE_LEN)
    # approx reciprocal in the softmax denominator => slightly relaxed tolerance vs exact f32 ref
    assert jnp.allclose(probs, ref, rtol=1e-3, atol=1e-3)

    print("KERNEL_OK")
</pallas_src>

<mosaic_0001>
module attributes {stable_mosaic.version = 11 : i64} {
  func.func @model_kernel(%arg0: memref<64x128xf32, #tpu.memory_space<vmem>>, %arg1: memref<128x128xf32, #tpu.memory_space<vmem>>, %arg2: memref<128x128xf32, #tpu.memory_space<vmem>>, %arg3: memref<1x128xf32, #tpu.memory_space<vmem>>, %arg4: memref<8x128xf32, #tpu.memory_space<vmem>>) attributes {dimension_semantics = [], scalar_prefetch = 0 : i64, scratch_operands = 0 : i64, tpu.core_type = #tpu.core_type<tc>} {
    %c0 = arith.constant 0 : index
    %c0_0 = arith.constant 0 : index
    %0 = vector.load %arg1[%c0, %c0_0] : memref<128x128xf32, #tpu.memory_space<vmem>>, vector<128x128xf32>
    %cst = arith.constant 0.000000e+00 : f32
    %1 = vector.broadcast %cst : f32 to vector<8x128xf32>
    %c0_i32 = arith.constant 0 : i32
    %c8_i32 = arith.constant 8 : i32
    %2 = arith.muli %c0_i32, %c8_i32 : i32
    %3 = tpu.assume_multiple %2, 8 : i32
    %4 = arith.index_cast %3 : i32 to index
    %c0_1 = arith.constant 0 : index
    %5 = vector.load %arg0[%4, %c0_1] : memref<64x128xf32, #tpu.memory_space<vmem>>, vector<8x128xf32>
    %cst_2 = arith.constant dense<0.000000e+00> : vector<8x128xf32>
    %6 = tpu.matmul %1, %0, %cst_2 {dimension_numbers = #tpu.dot_dimension_numbers<[1], [0], [0], [1], [0, 0, 1, 1], [], []>} : vector<8x128xf32>, vector<128x128xf32>, vector<8x128xf32> -> vector<8x128xf32>
    %7 = arith.addf %5, %6 : vector<8x128xf32>
    %8 = math.tanh %7 : vector<8x128xf32>
    %c1_i32 = arith.constant 1 : i32
    %c8_i32_3 = arith.constant 8 : i32
    %9 = arith.muli %c1_i32, %c8_i32_3 : i32
    %10 = tpu.assume_multiple %9, 8 : i32
    %11 = arith.index_cast %10 : i32 to index
    %c0_4 = arith.constant 0 : index
    %12 = vector.load %arg0[%11, %c0_4] : memref<64x128xf32, #tpu.memory_space<vmem>>, vector<8x128xf32>
    %cst_5 = arith.constant dense<0.000000e+00> : vector<8x128xf32>
    %13 = tpu.matmul %8, %0, %cst_5 {dimension_numbers = #tpu.dot_dimension_numbers<[1], [0], [0], [1], [0, 0, 1, 1], [], []>} : vector<8x128xf32>, vector<128x128xf32>, vector<8x128xf32> -> vector<8x128xf32>
    %14 = arith.addf %12, %13 : vector<8x128xf32>
    %15 = math.tanh %14 : vector<8x128xf32>
    %c2_i32 = arith.constant 2 : i32
    %c8_i32_6 = arith.constant 8 : i32
    %16 = arith.muli %c2_i32, %c8_i32_6 : i32
    %17 = tpu.assume_multiple %16, 8 : i32
    %18 = arith.index_cast %17 : i32 to index
    %c0_7 = arith.constant 0 : index
    %19 = vector.load %arg0[%18, %c0_7] : memref<64x128xf32, #tpu.memory_space<vmem>>, vector<8x128xf32>
    %cst_8 = arith.constant dense<0.000000e+00> : vector<8x128xf32>
    %20 = tpu.matmul %15, %0, %cst_8 {dimension_numbers = #tpu.dot_dimension_numbers<[1], [0], [0], [1], [0, 0, 1, 1], [], []>} : vector<8x128xf32>, vector<128x128xf32>, vector<8x128xf32> -> vector<8x128xf32>
    %21 = arith.addf %19, %20 : vector<8x128xf32>
    %22 = math.tanh %21 : vector<8x128xf32>
    %c3_i32 = arith.constant 3 : i32
    %c8_i32_9 = arith.constant 8 : i32
    %23 = arith.muli %c3_i32, %c8_i32_9 : i32
    %24 = tpu.assume_multiple %23, 8 : i32
    %25 = arith.index_cast %24 : i32 to index
    %c0_10 = arith.constant 0 : index
    %26 = vector.load %arg0[%25, %c0_10] : memref<64x128xf32, #tpu.memory_space<vmem>>, vector<8x128xf32>
    %cst_11 = arith.constant dense<0.000000e+00> : vector<8x128xf32>
    %27 = tpu.matmul %22, %0, %cst_11 {dimension_numbers = #tpu.dot_dimension_numbers<[1], [0], [0], [1], [0, 0, 1, 1], [], []>} : vector<8x128xf32>, vector<128x128xf32>, vector<8x128xf32> -> vector<8x128xf32>
    %28 = arith.addf %26, %27 : vector<8x128xf32>
    %29 = math.tanh %28 : vector<8x128xf32>
    %c4_i32 = arith.constant 4 : i32
    %c8_i32_12 = arith.constant 8 : i32
    %30 = arith.muli %c4_i32, %c8_i32_12 : i32
    %31 = tpu.assume_multiple %30, 8 : i32
    %32 = arith.index_cast %31 : i32 to index
    %c0_13 = arith.constant 0 : index
    %33 = vector.load %arg0[%32, %c0_13] : memref<64x128xf32, #tpu.memory_space<vmem>>, vector<8x128xf32>
    %cst_14 = arith.constant dense<0.000000e+00> : vector<8x128xf32>
    %34 = tpu.matmul %29, %0, %cst_14 {dimension_numbers = #tpu.dot_dimension_numbers<[1], [0], [0], [1], [0, 0, 1, 1], [], []>} : vector<8x128xf32>, vector<128x128xf32>, vector<8x128xf32> -> vector<8x128xf32>
    %35 = arith.addf %33, %34 : vector<8x128xf32>
    %36 = math.tanh %35 : vector<8x128xf32>
    %c5_i32 = arith.constant 5 : i32
    %c8_i32_15 = arith.constant 8 : i32
    %37 = arith.muli %c5_i32, %c8_i32_15 : i32
    %38 = tpu.assume_multiple %37, 8 : i32
    %39 = arith.index_cast %38 : i32 to index
    %c0_16 = arith.constant 0 : index
    %40 = vector.load %arg0[%39, %c0_16] : memref<64x128xf32, #tpu.memory_space<vmem>>, vector<8x128xf32>
    %cst_17 = arith.constant dense<0.000000e+00> : vector<8x128xf32>
    %41 = tpu.matmul %36, %0, %cst_17 {dimension_numbers = #tpu.dot_dimension_numbers<[1], [0], [0], [1], [0, 0, 1, 1], [], []>} : vector<8x128xf32>, vector<128x128xf32>, vector<8x128xf32> -> vector<8x128xf32>
    %42 = arith.addf %40, %41 : vector<8x128xf32>
    %43 = math.tanh %42 : vector<8x128xf32>
    %c6_i32 = arith.constant 6 : i32
    %c8_i32_18 = arith.constant 8 : i32
    %44 = arith.muli %c6_i32, %c8_i32_18 : i32
    %45 = tpu.assume_multiple %44, 8 : i32
    %46 = arith.index_cast %45 : i32 to index
    %c0_19 = arith.constant 0 : index
    %47 = vector.load %arg0[%46, %c0_19] : memref<64x128xf32, #tpu.memory_space<vmem>>, vector<8x128xf32>
    %cst_20 = arith.constant dense<0.000000e+00> : vector<8x128xf32>
    %48 = tpu.matmul %43, %0, %cst_20 {dimension_numbers = #tpu.dot_dimension_numbers<[1], [0], [0], [1], [0, 0, 1, 1], [], []>} : vector<8x128xf32>, vector<128x128xf32>, vector<8x128xf32> -> vector<8x128xf32>
    %49 = arith.addf %47, %48 : vector<8x128xf32>
    %50 = math.tanh %49 : vector<8x128xf32>
    %c7_i32 = arith.constant 7 : i32
    %c8_i32_21 = arith.constant 8 : i32
    %51 = arith.muli %c7_i32, %c8_i32_21 : i32
    %52 = tpu.assume_multiple %51, 8 : i32
    %53 = arith.index_cast %52 : i32 to index
    %c0_22 = arith.constant 0 : index
    %54 = vector.load %arg0[%53, %c0_22] : memref<64x128xf32, #tpu.memory_space<vmem>>, vector<8x128xf32>
    %cst_23 = arith.constant dense<0.000000e+00> : vector<8x128xf32>
    %55 = tpu.matmul %50, %0, %cst_23 {dimension_numbers = #tpu.dot_dimension_numbers<[1], [0], [0], [1], [0, 0, 1, 1], [], []>} : vector<8x128xf32>, vector<128x128xf32>, vector<8x128xf32> -> vector<8x128xf32>
    %56 = arith.addf %54, %55 : vector<8x128xf32>
    %57 = math.tanh %56 : vector<8x128xf32>
    %c8_i32_24 = arith.constant 8 : i32
    %c0_25 = arith.constant 0 : index
    %c0_26 = arith.constant 0 : index
    %58 = vector.load %arg2[%c0_25, %c0_26] : memref<128x128xf32, #tpu.memory_space<vmem>>, vector<128x128xf32>
    %cst_27 = arith.constant dense<0.000000e+00> : vector<8x128xf32>
    %59 = tpu.matmul %57, %58, %cst_27 {dimension_numbers = #tpu.dot_dimension_numbers<[1], [0], [0], [1], [0, 0, 1, 1], [], []>} : vector<8x128xf32>, vector<128x128xf32>, vector<8x128xf32> -> vector<8x128xf32>
    %c0_28 = arith.constant 0 : index
    %c0_29 = arith.constant 0 : index
    %60 = vector.load %arg3[%c0_28, %c0_29] : memref<1x128xf32, #tpu.memory_space<vmem>>, vector<1x128xf32>
    %61 = vector.broadcast %60 : vector<1x128xf32> to vector<8x128xf32>
    %62 = arith.addf %59, %61 : vector<8x128xf32>
    %cst_30 = arith.constant dense<0xFF800000> : vector<8xf32>
    %63 = vector.multi_reduction <maximumf>, %62, %cst_30 [1] : vector<8x128xf32> to vector<8xf32>
    %64 = vector.shape_cast %63 : vector<8xf32> to vector<8x1xf32>
    %65 = vector.broadcast %64 : vector<8x1xf32> to vector<8x128xf32>
    %66 = arith.subf %62, %65 : vector<8x128xf32>
    %67 = math.exp %66 : vector<8x128xf32>
    %cst_31 = arith.constant dense<0.000000e+00> : vector<8xf32>
    %68 = vector.multi_reduction <add>, %67, %cst_31 [1] : vector<8x128xf32> to vector<8xf32>
    %69 = vector.shape_cast %68 : vector<8xf32> to vector<8x1xf32>
    %70 = tpu.reciprocal %69 {approx = true} : vector<8x1xf32> -> vector<8x1xf32>
    %71 = vector.broadcast %70 : vector<8x1xf32> to vector<8x128xf32>
    %72 = arith.mulf %67, %71 : vector<8x128xf32>
    %c0_32 = arith.constant 0 : index
    %c0_33 = arith.constant 0 : index
    %73 = vector.load %arg4[%c0_32, %c0_33] : memref<8x128xf32, #tpu.memory_space<vmem>>, vector<8x128xf32>
    tpu.vector_store %arg4[%c0_32, %c0_33], %72 {strides = array<i32>} : memref<8x128xf32, #tpu.memory_space<vmem>>, vector<8x128xf32>,
    return
  }
}

</mosaic_0001>

<llo_original>
// kernel: model_forward.1
$region0: #{model_forward.1}
  #allocation0 [shape = 'u32[]', space=smem, size = 0x4, offset = 0x4, fixed_abs, tag = 'smem constant byte address 0x4 - core index']
  #allocation1 [shape = 'u32[72,128]{1,0:T(1,128)}', space=vmem, size = 0x9000, scoped, tag = 'internal scratch']
  %s0 = inlined_call_operand.vmem [shape: f32[64,128], index: 0, kind: input, shape index: {}]
  %s1 = inlined_call_operand.vmem [shape: f32[128,128], index: 1, kind: input, shape index: {}]
  %s2 = inlined_call_operand.vmem [shape: f32[128,128], index: 2, kind: input, shape index: {}]
  %s3 = inlined_call_operand.vmem [shape: f32[1,128], index: 3, kind: input, shape index: {}]
  %s4 = inlined_call_operand.vmem [shape: f32[8,128], index: 4, kind: output, shape index: {}]
  %s5 = sld [smem:[#allocation0]]
  $region26: #{model_forward.1} parent=0
    _
  %s7 = ssub.s32 1, %s5
  %s8 = scalar_select 0, %s7, %s5
  // Predicated region
  $region2: #{model_forward.1} parent=0 // pred_check
    _
  $region3: #{model_forward.1} parent=0 // pred_check_branch
    %10 = sbr.rel (0) target = $region5
  $region4: #{model_forward.1} parent=0 // pred_region
    _
  $region5: #{model_forward.1} parent=0 // pred_fallthru
    _
  // Predicated region
  $region6: #{model_forward.1} parent=0 // pred_check
    _
  $region7: #{model_forward.1} parent=0 // pred_check_branch
    %12 = sbr.rel (0) target = $region9
  $region8: #{model_forward.1} parent=0 // pred_region
    _
  $region9: #{model_forward.1} parent=0 // pred_fallthru
    _
  // Predicated region
  $region10: #{model_forward.1} parent=0 // pred_check
    _
  $region11: #{model_forward.1} parent=0 // pred_check_branch
    %14 = sbr.rel (0) target = $region13
  $region12: #{model_forward.1} parent=0 // pred_region
    _
  $region13: #{model_forward.1} parent=0 // pred_fallthru
    _
  // Predicated region
  $region14: #{model_forward.1} parent=0 // pred_check
    _
  $region15: #{model_forward.1} parent=0 // pred_check_branch
    %16 = sbr.rel (0) target = $region17
  $region16: #{model_forward.1} parent=0 // pred_region
    _
  $region17: #{model_forward.1} parent=0 // pred_fallthru
    _
  %v17 = vld [vmem:[%s1] sm:$0xff]
  %v18 = vld [vmem:[%s1 + $0x8] sm:$0xff]
  %v19 = vld [vmem:[%s1 + $0x10] sm:$0xff]
  %v20 = vld [vmem:[%s1 + $0x18] sm:$0xff]
  %v21 = vld [vmem:[%s1 + $0x20] sm:$0xff]
  %v22 = vld [vmem:[%s1 + $0x28] sm:$0xff]
  %v23 = vld [vmem:[%s1 + $0x30] sm:$0xff]
  %v24 = vld [vmem:[%s1 + $0x38] sm:$0xff]
  %v25 = vld [vmem:[%s1 + $0x40] sm:$0xff]
  %v26 = vld [vmem:[%s1 + $0x48] sm:$0xff]
  %v27 = vld [vmem:[%s1 + $0x50] sm:$0xff]
  %v28 = vld [vmem:[%s1 + $0x58] sm:$0xff]
  %v29 = vld [vmem:[%s1 + $0x60] sm:$0xff]
  %v30 = vld [vmem:[%s1 + $0x68] sm:$0xff]
  %v31 = vld [vmem:[%s1 + $0x70] sm:$0xff]
  %v32 = vld [vmem:[%s1 + $0x78] sm:$0xff]
  %v33 = vld [vmem:[%s0] sm:$0xff]
  %34 = vmatpush.msra.mxu0 %v32
  %35 = vmatpush.msra.mxu0 %v31
  %36 = vmatpush.msra.mxu0 %v30
  %37 = vmatpush.msra.mxu0 %v29
  %38 = vmatpush.msra.mxu0 %v28
  %39 = vmatpush.msra.mxu0 %v27
  %40 = vmatpush.msra.mxu0 %v26
  %41 = vmatpush.msra.mxu0 %v25
  %42 = vmatpush.msra.mxu0 %v24
  %43 = vmatpush.msra.mxu0 %v23
  %44 = vmatpush.msra.mxu0 %v22
  %45 = vmatpush.msra.mxu0 %v21
  %46 = vmatpush.msra.mxu0 %v20
  %47 = vmatpush.msra.mxu0 %v19
  %48 = vmatpush.msra.mxu0 %v18
  %49 = vmatpush.msra.mxu0 %v17
  %50 = vmatmul.f32.gmra.mxu0 0.0
  %v51 = vpop.f32.mrf.mxu0
  %v52 = vadd.f32 0.0, %v51
  %53 = vdwg.mxu0
  %v54 = vadd.f32 %v33, %v52
  %v55 = vtanh.pop %v54
  %s56 = scalar_lea.vmem %s0, 8
  %v57 = vld [vmem:[%s56] sm:$0xff]
  %58 = vmatpush.msra.mxu0 %v32
  %59 = vmatpush.msra.mxu0 %v31
  %60 = vmatpush.msra.mxu0 %v30
  %61 = vmatpush.msra.mxu0 %v29
  %62 = vmatpush.msra.mxu0 %v28
  %63 = vmatpush.msra.mxu0 %v27
  %64 = vmatpush.msra.mxu0 %v26
  %65 = vmatpush.msra.mxu0 %v25
  %66 = vmatpush.msra.mxu0 %v24
  %67 = vmatpush.msra.mxu0 %v23
  %68 = vmatpush.msra.mxu0 %v22
  %69 = vmatpush.msra.mxu0 %v21
  %70 = vmatpush.msra.mxu0 %v20
  %71 = vmatpush.msra.mxu0 %v19
  %72 = vmatpush.msra.mxu0 %v18
  %73 = vmatpush.msra.mxu0 %v17
  %74 = vmatmul.f32.gmra.mxu0 %v55
  %v75 = vpop.f32.mrf.mxu0
  %v76 = vadd.f32 0.0, %v75
  %77 = vdwg.mxu0
  %v78 = vadd.f32 %v57, %v76
  %v79 = vtanh.pop %v78
  %s80 = scalar_lea.vmem %s0, 16
  %v81 = vld [vmem:[%s80] sm:$0xff]
  %82 = vmatpush.msra.mxu0 %v32
  %83 = vmatpush.msra.mxu0 %v31
  %84 = vmatpush.msra.mxu0 %v30
  %85 = vmatpush.msra.mxu0 %v29
  %86 = vmatpush.msra.mxu0 %v28
  %87 = vmatpush.msra.mxu0 %v27
  %88 = vmatpush.msra.mxu0 %v26
  %89 = vmatpush.msra.mxu0 %v25
  %90 = vmatpush.msra.mxu0 %v24
  %91 = vmatpush.msra.mxu0 %v23
  %92 = vmatpush.msra.mxu0 %v22
  %93 = vmatpush.msra.mxu0 %v21
  %94 = vmatpush.msra.mxu0 %v20
  %95 = vmatpush.msra.mxu0 %v19
  %96 = vmatpush.msra.mxu0 %v18
  %97 = vmatpush.msra.mxu0 %v17
  %98 = vmatmul.f32.gmra.mxu0 %v79
  %v99 = vpop.f32.mrf.mxu0
  %v100 = vadd.f32 0.0, %v99
  %101 = vdwg.mxu0
  %v102 = vadd.f32 %v81, %v100
  %v103 = vtanh.pop %v102
  %s104 = scalar_lea.vmem %s0, 24
  %v105 = vld [vmem:[%s104] sm:$0xff]
  %106 = vmatpush.msra.mxu0 %v32
  %107 = vmatpush.msra.mxu0 %v31
  %108 = vmatpush.msra.mxu0 %v30
  %109 = vmatpush.msra.mxu0 %v29
  %110 = vmatpush.msra.mxu0 %v28
  %111 = vmatpush.msra.mxu0 %v27
  %112 = vmatpush.msra.mxu0 %v26
  %113 = vmatpush.msra.mxu0 %v25
  %114 = vmatpush.msra.mxu0 %v24
  %115 = vmatpush.msra.mxu0 %v23
  %116 = vmatpush.msra.mxu0 %v22
  %117 = vmatpush.msra.mxu0 %v21
  %118 = vmatpush.msra.mxu0 %v20
  %119 = vmatpush.msra.mxu0 %v19
  %120 = vmatpush.msra.mxu0 %v18
  %121 = vmatpush.msra.mxu0 %v17
  %122 = vmatmul.f32.gmra.mxu0 %v103
  %v123 = vpop.f32.mrf.mxu0
  %v124 = vadd.f32 0.0, %v123
  %125 = vdwg.mxu0
  %v126 = vadd.f32 %v105, %v124
  %v127 = vtanh.pop %v126
  %s128 = scalar_lea.vmem %s0, 32
  %v129 = vld [vmem:[%s128] sm:$0xff]
  %130 = vmatpush.msra.mxu0 %v32
  %131 = vmatpush.msra.mxu0 %v31
  %132 = vmatpush.msra.mxu0 %v30
  %133 = vmatpush.msra.mxu0 %v29
  %134 = vmatpush.msra.mxu0 %v28
  %135 = vmatpush.msra.mxu0 %v27
  %136 = vmatpush.msra.mxu0 %v26
  %137 = vmatpush.msra.mxu0 %v25
  %138 = vmatpush.msra.mxu0 %v24
  %139 = vmatpush.msra.mxu0 %v23
  %140 = vmatpush.msra.mxu0 %v22
  %141 = vmatpush.msra.mxu0 %v21
  %142 = vmatpush.msra.mxu0 %v20
  %143 = vmatpush.msra.mxu0 %v19
  %144 = vmatpush.msra.mxu0 %v18
  %145 = vmatpush.msra.mxu0 %v17
  %146 = vmatmul.f32.gmra.mxu0 %v127
  %v147 = vpop.f32.mrf.mxu0
  %v148 = vadd.f32 0.0, %v147
  %149 = vdwg.mxu0
  %v150 = vadd.f32 %v129, %v148
  %v151 = vtanh.pop %v150
  %s152 = scalar_lea.vmem %s0, 40
  %v153 = vld [vmem:[%s152] sm:$0xff]
  %154 = vmatpush.msra.mxu0 %v32
  %155 = vmatpush.msra.mxu0 %v31
  %156 = vmatpush.msra.mxu0 %v30
  %157 = vmatpush.msra.mxu0 %v29
  %158 = vmatpush.msra.mxu0 %v28
  %159 = vmatpush.msra.mxu0 %v27
  %160 = vmatpush.msra.mxu0 %v26
  %161 = vmatpush.msra.mxu0 %v25
  %162 = vmatpush.msra.mxu0 %v24
  %163 = vmatpush.msra.mxu0 %v23
  %164 = vmatpush.msra.mxu0 %v22
  %165 = vmatpush.msra.mxu0 %v21
  %166 = vmatpush.msra.mxu0 %v20
  %167 = vmatpush.msra.mxu0 %v19
  %168 = vmatpush.msra.mxu0 %v18
  %169 = vmatpush.msra.mxu0 %v17
  %170 = vmatmul.f32.gmra.mxu0 %v151
  %v171 = vpop.f32.mrf.mxu0
  %v172 = vadd.f32 0.0, %v171
  %173 = vdwg.mxu0
  %v174 = vadd.f32 %v153, %v172
  %v175 = vtanh.pop %v174
  %s176 = scalar_lea.vmem %s0, 48
  %v177 = vld [vmem:[%s176] sm:$0xff]
  %178 = vmatpush.msra.mxu0 %v32
  %179 = vmatpush.msra.mxu0 %v31
  %180 = vmatpush.msra.mxu0 %v30
  %181 = vmatpush.msra.mxu0 %v29
  %182 = vmatpush.msra.mxu0 %v28
  %183 = vmatpush.msra.mxu0 %v27
  %184 = vmatpush.msra.mxu0 %v26
  %185 = vmatpush.msra.mxu0 %v25
  %186 = vmatpush.msra.mxu0 %v24
  %187 = vmatpush.msra.mxu0 %v23
  %188 = vmatpush.msra.mxu0 %v22
  %189 = vmatpush.msra.mxu0 %v21
  %190 = vmatpush.msra.mxu0 %v20
  %191 = vmatpush.msra.mxu0 %v19
  %192 = vmatpush.msra.mxu0 %v18
  %193 = vmatpush.msra.mxu0 %v17
  %194 = vmatmul.f32.gmra.mxu0 %v175
  %v195 = vpop.f32.mrf.mxu0
  %v196 = vadd.f32 0.0, %v195
  %197 = vdwg.mxu0
  %v198 = vadd.f32 %v177, %v196
  %v199 = vtanh.pop %v198
  %s200 = scalar_lea.vmem %s0, 56
  %v201 = vld [vmem:[%s200] sm:$0xff]
  %202 = vmatpush.msra.mxu0 %v32
  %203 = vmatpush.msra.mxu0 %v31
  %204 = vmatpush.msra.mxu0 %v30
  %205 = vmatpush.msra.mxu0 %v29
  %206 = vmatpush.msra.mxu0 %v28
  %207 = vmatpush.msra.mxu0 %v27
  %208 = vmatpush.msra.mxu0 %v26
  %209 = vmatpush.msra.mxu0 %v25
  %210 = vmatpush.msra.mxu0 %v24
  %211 = vmatpush.msra.mxu0 %v23
  %212 = vmatpush.msra.mxu0 %v22
  %213 = vmatpush.msra.mxu0 %v21
  %214 = vmatpush.msra.mxu0 %v20
  %215 = vmatpush.msra.mxu0 %v19
  %216 = vmatpush.msra.mxu0 %v18
  %217 = vmatpush.msra.mxu0 %v17
  %218 = vmatmul.f32.gmra.mxu0 %v199
  %v219 = vpop.f32.mrf.mxu0
  %v220 = vadd.f32 0.0, %v219
  %221 = vdwg.mxu0
  %v222 = vadd.f32 %v201, %v220
  %v223 = vtanh.pop %v222
  %v224 = vld [vmem:[%s2] sm:$0xff]
  %v225 = vld [vmem:[%s2 + $0x8] sm:$0xff]
  %v226 = vld [vmem:[%s2 + $0x10] sm:$0xff]
  %v227 = vld [vmem:[%s2 + $0x18] sm:$0xff]
  %v228 = vld [vmem:[%s2 + $0x20] sm:$0xff]
  %v229 = vld [vmem:[%s2 + $0x28] sm:$0xff]
  %v230 = vld [vmem:[%s2 + $0x30] sm:$0xff]
  %v231 = vld [vmem:[%s2 + $0x38] sm:$0xff]
  %v232 = vld [vmem:[%s2 + $0x40] sm:$0xff]
  %v233 = vld [vmem:[%s2 + $0x48] sm:$0xff]
  %v234 = vld [vmem:[%s2 + $0x50] sm:$0xff]
  %v235 = vld [vmem:[%s2 + $0x58] sm:$0xff]
  %v236 = vld [vmem:[%s2 + $0x60] sm:$0xff]
  %v237 = vld [vmem:[%s2 + $0x68] sm:$0xff]
  %v238 = vld [vmem:[%s2 + $0x70] sm:$0xff]
  %v239 = vld [vmem:[%s2 + $0x78] sm:$0xff]
  %v240 = vld [vmem:[%s3] sm:$0x1]
  %v242 = vperm.slane %v240, 0
  %244 = vmatpush.msra.mxu0 %v239
  %245 = vmatpush.msra.mxu0 %v238
  %246 = vmatpush.msra.mxu0 %v237
  %247 = vmatpush.msra.mxu0 %v236
  %248 = vmatpush.msra.mxu0 %v235
  %249 = vmatpush.msra.mxu0 %v234
  %250 = vmatpush.msra.mxu0 %v233
  %251 = vmatpush.msra.mxu0 %v232
  %252 = vmatpush.msra.mxu0 %v231
  %253 = vmatpush.msra.mxu0 %v230
  %254 = vmatpush.msra.mxu0 %v229
  %255 = vmatpush.msra.mxu0 %v228
  %256 = vmatpush.msra.mxu0 %v227
  %257 = vmatpush.msra.mxu0 %v226
  %258 = vmatpush.msra.mxu0 %v225
  %259 = vmatpush.msra.mxu0 %v224
  %260 = vmatmul.f32.gmra.mxu0 %v223
  %v261 = vpop.f32.mrf.mxu0
  %v262 = vadd.f32 %v242, %v261
  %263 = vdwg.mxu0
  %264 = vmax.xlane.f32.xlu0 %v262
  %v265 = vpop.xlane.xlu0 %264
  %v266 = vsub.f32 %v262, %v265
  %v267 = vmul.f32 %v266, 1.442695
  %v268 = vpow.pop %v267
  %269 = vadd.xlane.f32.xlu0 %v268
  %v270 = vpop.xlane.xlu0 %269
  %v271 = vrcp.pop %v270
  %v272 = vmul.f32 %v268, %v271
  %273 = vst [vmem:[%s4] sm:$0xff] %v272
  // Predicated region
  $region18: #{model_forward.1} parent=0 // pred_check
    _
  $region19: #{model_forward.1} parent=0 // pred_check_branch
    %275 = sbr.rel (0) target = $region21
  $region20: #{model_forward.1} parent=0 // pred_region
    _
  $region21: #{model_forward.1} parent=0 // pred_fallthru
    _
  // Predicated region
  $region22: #{model_forward.1} parent=0 // pred_check
    _
  $region23: #{model_forward.1} parent=0 // pred_check_branch
    %277 = sbr.rel (0) target = $region25
  $region24: #{model_forward.1} parent=0 // pred_region
    _
  $region25: #{model_forward.1} parent=0 // pred_fallthru
    _

</llo_original>
